<compile_context>
chip_gen: v6e
topology: v6e:2x2x1
jax: 0.10.0
libtpu: 0.0.40
codegen_flags: <defaults>
</compile_context>

<pallas_src>
import jax
import jax.numpy as jnp
from jax.experimental import pallas as pl
from jax.experimental.pallas import tpu as pltpu

BATCH = 2
SEQ = 8
HIDDEN = 32
MLP_HIDDEN = 64

_TM_MAX = 8192   # row-tile cap for the streamed path (multiple of 8)
_SMALL_M = 512   # <= this many rows -> single gridless call


def _mlp_identity_kernel(x_ref, w1_ref, b1_ref, w2_ref, b2_ref, o_ref):
    # --- self.model(x): Linear -> ReLU -> Linear ---
    # x arrives f32 straight from HBM; cast to bf16 in-kernel (VPU work hidden
    # under the DMA) so the wrapper never materializes an extra bf16 copy.
    x = x_ref[...].astype(jnp.bfloat16)
    h = jnp.dot(x, w1_ref[...], preferred_element_type=jnp.float32)
    h = jnp.maximum(h + b1_ref[...], 0.0)
    y = jnp.dot(h.astype(jnp.bfloat16), w2_ref[...],
                preferred_element_type=jnp.float32)
    y = y + b2_ref[...]
    # --- self.explanation_layer(x): nn.Identity() -> pure pass-through ---
    o_ref[...] = y.astype(o_ref.dtype)


@jax.jit
def explainable_model_forward(x, w1, b1, w2, b2):
    """x: [B, S, H] float32. Returns (y, explanation), both [B, S, H] f32."""
    B, S, H = x.shape
    M = B * S
    out_dtype = x.dtype

    x2d = x.reshape(M, H)             # stays f32; cast happens inside kernel
    w1b = w1.astype(jnp.bfloat16)     # tiny weights: cast once in wrapper
    w2b = w2.astype(jnp.bfloat16)

    if M <= _SMALL_M:
        # Small problem: one gridless call, whole arrays resident in VMEM.
        vmem_spec = pl.BlockSpec(memory_space=pltpu.MemorySpace.VMEM)
        out2d = pl.pallas_call(
            _mlp_identity_kernel,
            out_shape=jax.ShapeDtypeStruct((M, H), out_dtype),
            in_specs=[vmem_spec] * 5,
            out_specs=vmem_spec,
        )(x2d, w1b, b1, w2b, b2)
    else:
        # Large problem: stream row tiles; weights/biases use constant
        # index_maps so they are fetched once and stay VMEM-resident.
        # tm: big enough to amortize per-step overhead, small enough that the
        # grid has >= 2 steps (v7x megacore) and the double-buffered,
        # 128-lane-padded blocks fit scoped VMEM on all generations.
        tm = min(_TM_MAX, max(8, ((-(-M // 2)) + 7) // 8 * 8))
        out2d = pl.pallas_call(
            _mlp_identity_kernel,
            out_shape=jax.ShapeDtypeStruct((M, H), out_dtype),
            grid=(pl.cdiv(M, tm),),
            in_specs=[
                pl.BlockSpec((tm, H), lambda i: (i, 0)),
                pl.BlockSpec((H, MLP_HIDDEN), lambda i: (0, 0)),
                pl.BlockSpec((1, MLP_HIDDEN), lambda i: (0, 0)),
                pl.BlockSpec((MLP_HIDDEN, H), lambda i: (0, 0)),
                pl.BlockSpec((1, H), lambda i: (0, 0)),
            ],
            out_specs=pl.BlockSpec((tm, H), lambda i: (i, 0)),
            compiler_params=pltpu.CompilerParams(
                dimension_semantics=("parallel",),
                vmem_limit_bytes=48 * 1024 * 1024),
        )(x2d, w1b, b1, w2b, b2)

    y = out2d.reshape(B, S, H)
    # nn.Identity(): explanation is the same tensor as the model output.
    return y, y


def _reference_forward(x, w1, b1, w2, b2):
    # Pure-JAX reference with the same bf16-input / f32-accumulate casting.
    f32 = jnp.float32
    xb = x.astype(jnp.bfloat16).astype(f32)
    w1b = w1.astype(jnp.bfloat16).astype(f32)
    w2b = w2.astype(jnp.bfloat16).astype(f32)
    h = jnp.maximum(jnp.einsum("bsh,hk->bsk", xb, w1b) + b1[0], 0.0)
    hb = h.astype(jnp.bfloat16).astype(f32)
    y = jnp.einsum("bsk,kh->bsh", hb, w2b) + b2[0]
    return y, y  # Identity explanation


if __name__ == "__main__":
    key = jax.random.PRNGKey(0)
    kx, k1, k2, k3, k4 = jax.random.split(key, 5)

    # Deterministic parameter init (synthetic; no checkpoint load).
    x = jax.random.normal(kx, (BATCH, SEQ, HIDDEN), dtype=jnp.float32)
    w1 = jax.random.normal(k1, (HIDDEN, MLP_HIDDEN), dtype=jnp.float32) * 0.05
    b1 = jax.random.normal(k2, (1, MLP_HIDDEN), dtype=jnp.float32) * 0.01
    w2 = jax.random.normal(k3, (MLP_HIDDEN, HIDDEN), dtype=jnp.float32) * 0.05
    b2 = jax.random.normal(k4, (1, HIDDEN), dtype=jnp.float32) * 0.01

    y, expl = explainable_model_forward(x, w1, b1, w2, b2)
    y = jax.block_until_ready(y)
    expl = jax.block_until_ready(expl)

    y_ref, expl_ref = _reference_forward(x, w1, b1, w2, b2)
    assert y.shape == (BATCH, SEQ, HIDDEN)
    assert expl.shape == (BATCH, SEQ, HIDDEN)
    assert jnp.allclose(y, y_ref, atol=1e-3, rtol=1e-3), "model output mismatch"
    assert jnp.array_equal(expl, y), "explanation must equal model output"

    print("KERNEL_OK")
</pallas_src>

<mosaic_0001>
module attributes {stable_mosaic.version = 11 : i64} {
  func.func @_mlp_identity_kernel(%arg0: memref<16x32xf32, #tpu.memory_space<vmem>>, %arg1: memref<32x64xbf16, #tpu.memory_space<vmem>>, %arg2: memref<1x64xf32, #tpu.memory_space<vmem>>, %arg3: memref<64x32xbf16, #tpu.memory_space<vmem>>, %arg4: memref<1x32xf32, #tpu.memory_space<vmem>>, %arg5: memref<16x32xf32, #tpu.memory_space<vmem>>) attributes {dimension_semantics = [], scalar_prefetch = 0 : i64, scratch_operands = 0 : i64, tpu.core_type = #tpu.core_type<tc>} {
    %c0 = arith.constant 0 : index
    %c0_0 = arith.constant 0 : index
    %0 = vector.load %arg0[%c0, %c0_0] : memref<16x32xf32, #tpu.memory_space<vmem>>, vector<16x32xf32>
    %1 = arith.truncf %0 : vector<16x32xf32> to vector<16x32xbf16>
    %c0_1 = arith.constant 0 : index
    %c0_2 = arith.constant 0 : index
    %2 = vector.load %arg1[%c0_1, %c0_2] : memref<32x64xbf16, #tpu.memory_space<vmem>>, vector<32x64xbf16>
    %cst = arith.constant dense<0.000000e+00> : vector<16x64xf32>
    %3 = tpu.matmul %1, %2, %cst {dimension_numbers = #tpu.dot_dimension_numbers<[1], [0], [0], [1], [0, 0, 1, 1], [], []>} : vector<16x32xbf16>, vector<32x64xbf16>, vector<16x64xf32> -> vector<16x64xf32>
    %c0_3 = arith.constant 0 : index
    %c0_4 = arith.constant 0 : index
    %4 = vector.load %arg2[%c0_3, %c0_4] : memref<1x64xf32, #tpu.memory_space<vmem>>, vector<1x64xf32>
    %5 = vector.broadcast %4 : vector<1x64xf32> to vector<16x64xf32>
    %6 = arith.addf %3, %5 : vector<16x64xf32>
    %cst_5 = arith.constant 0.000000e+00 : f32
    %7 = vector.broadcast %cst_5 : f32 to vector<16x64xf32>
    %8 = arith.maximumf %6, %7 : vector<16x64xf32>
    %9 = arith.truncf %8 : vector<16x64xf32> to vector<16x64xbf16>
    %c0_6 = arith.constant 0 : index
    %c0_7 = arith.constant 0 : index
    %10 = vector.load %arg3[%c0_6, %c0_7] : memref<64x32xbf16, #tpu.memory_space<vmem>>, vector<64x32xbf16>
    %cst_8 = arith.constant dense<0.000000e+00> : vector<16x32xf32>
    %11 = tpu.matmul %9, %10, %cst_8 {dimension_numbers = #tpu.dot_dimension_numbers<[1], [0], [0], [1], [0, 0, 1, 1], [], []>} : vector<16x64xbf16>, vector<64x32xbf16>, vector<16x32xf32> -> vector<16x32xf32>
    %c0_9 = arith.constant 0 : index
    %c0_10 = arith.constant 0 : index
    %12 = vector.load %arg4[%c0_9, %c0_10] : memref<1x32xf32, #tpu.memory_space<vmem>>, vector<1x32xf32>
    %13 = vector.broadcast %12 : vector<1x32xf32> to vector<16x32xf32>
    %14 = arith.addf %11, %13 : vector<16x32xf32>
    %c0_11 = arith.constant 0 : index
    %c0_12 = arith.constant 0 : index
    %15 = vector.load %arg5[%c0_11, %c0_12] : memref<16x32xf32, #tpu.memory_space<vmem>>, vector<16x32xf32>
    tpu.vector_store %arg5[%c0_11, %c0_12], %14 {strides = array<i32>} : memref<16x32xf32, #tpu.memory_space<vmem>>, vector<16x32xf32>,
    return
  }
}

</mosaic_0001>

<llo_original>
// kernel: explainable_model_forward.1
$region0: #{explainable_model_forward.1}
  #allocation0 [shape = 'u32[]', space=smem, size = 0x4, offset = 0x4, fixed_abs, tag = 'smem constant byte address 0x4 - core index']
  #allocation1 [shape = 'u32[144,128]{1,0:T(1,128)}', space=vmem, size = 0x12000, scoped, tag = 'internal scratch']
  %s0 = inlined_call_operand.vmem [shape: f32[16,32], index: 0, kind: input, shape index: {}]
  %s1 = inlined_call_operand.vmem [shape: bf16[32,64], index: 1, kind: input, shape index: {}]
  %s2 = inlined_call_operand.vmem [shape: f32[1,64], index: 2, kind: input, shape index: {}]
  %s3 = inlined_call_operand.vmem [shape: bf16[64,32], index: 3, kind: input, shape index: {}]
  %s4 = inlined_call_operand.vmem [shape: f32[1,32], index: 4, kind: input, shape index: {}]
  %s5 = inlined_call_operand.vmem [shape: f32[16,32], index: 5, kind: output, shape index: {}]
  %s6 = sld [smem:[#allocation0]]
  $region30: #{explainable_model_forward.1} parent=0
    _
  %s8 = ssub.s32 1, %s6
  %s9 = scalar_select 0, %s8, %s6
  // Predicated region
  $region2: #{explainable_model_forward.1} parent=0 // pred_check
    _
  $region3: #{explainable_model_forward.1} parent=0 // pred_check_branch
    %11 = sbr.rel (0) target = $region5
  $region4: #{explainable_model_forward.1} parent=0 // pred_region
    _
  $region5: #{explainable_model_forward.1} parent=0 // pred_fallthru
    _
  // Predicated region
  $region6: #{explainable_model_forward.1} parent=0 // pred_check
    _
  $region7: #{explainable_model_forward.1} parent=0 // pred_check_branch
    %13 = sbr.rel (0) target = $region9
  $region8: #{explainable_model_forward.1} parent=0 // pred_region
    _
  $region9: #{explainable_model_forward.1} parent=0 // pred_fallthru
    _
  // Predicated region
  $region10: #{explainable_model_forward.1} parent=0 // pred_check
    _
  $region11: #{explainable_model_forward.1} parent=0 // pred_check_branch
    %15 = sbr.rel (0) target = $region13
  $region12: #{explainable_model_forward.1} parent=0 // pred_region
    _
  $region13: #{explainable_model_forward.1} parent=0 // pred_fallthru
    _
  // Predicated region
  $region14: #{explainable_model_forward.1} parent=0 // pred_check
    _
  $region15: #{explainable_model_forward.1} parent=0 // pred_check_branch
    %17 = sbr.rel (0) target = $region17
  $region16: #{explainable_model_forward.1} parent=0 // pred_region
    _
  $region17: #{explainable_model_forward.1} parent=0 // pred_fallthru
    _
  // Predicated region
  $region18: #{explainable_model_forward.1} parent=0 // pred_check
    _
  $region19: #{explainable_model_forward.1} parent=0 // pred_check_branch
    %19 = sbr.rel (0) target = $region21
  $region20: #{explainable_model_forward.1} parent=0 // pred_region
    _
  $region21: #{explainable_model_forward.1} parent=0 // pred_fallthru
    _
  %v21 = vld [vmem:[%s0] sm:$0xff]
  %v22 = vld [vmem:[%s0 + $0x8] sm:$0xff]
  %v23 = vpack.c.bf16 %v22, %v21
  %v24 = vld [vmem:[%s1] sm:$0xf]
  %v25 = vld [vmem:[%s1 + $0x4] sm:$0xf]
  %v26 = vld [vmem:[%s1 + $0x8] sm:$0xf]
  %v27 = vld [vmem:[%s1 + $0xc] sm:$0xf]
  %v28 = vld [vmem:[%s2] sm:$0x1]
  %v30 = vlaneseq
  %v31 = vshrl.u32 %v30, 7
  %v32 = vsub.s32 0, %v31
  %v33 = vrot.slane %v28, %v32
  %v39 = vunpack.c.l.b16 %v24
  %v40 = vunpack.c.l.b16 %v25
  %v41 = vunpack.c.l.b16 %v26
  %v42 = vunpack.c.l.b16 %v27
  %v43 = vpack.c.b16 %v40, %v39
  %v44 = vpack.c.b16 %v42, %v41
  %vm47 = vcmask 261120
  %v49 = vsel %vm47, %v23, 0
  %51 = vmatprep.subr.bf16.mxu0 0
  %52 = vmatpush1.bf16.msra.mxu0 0
  %53 = vmatprep.subr.bf16.mxu0 0
  %54 = vmatpush1.bf16.msra.mxu0 0
  %55 = vmatprep.subr.bf16.mxu0 0
  %56 = vmatpush1.bf16.msra.mxu0 0
  %57 = vmatprep.subr.bf16.mxu0 0
  %58 = vmatpush1.bf16.msra.mxu0 0
  %59 = vmatprep.subr.bf16.mxu0 0
  %60 = vmatpush1.bf16.msra.mxu0 0
  %61 = vmatprep.subr.bf16.mxu0 0
  %62 = vmatpush1.bf16.msra.mxu0 0
  %63 = vmatprep.subr.bf16.mxu0 0
  %64 = vmatpush1.bf16.msra.mxu0 %v44
  %65 = vmatprep.subr.bf16.mxu0 0
  %66 = vmatpush1.bf16.msra.mxu0 %v43
  %67 = vmatprep.subr.bf16.mxu0 0
  %68 = vmatpush2.bf16.msra.mxu0 0
  %69 = vmatprep.subr.bf16.mxu0 0
  %70 = vmatpush2.bf16.msra.mxu0 0
  %71 = vmatprep.subr.bf16.mxu0 0
  %72 = vmatpush2.bf16.msra.mxu0 0
  %73 = vmatprep.subr.bf16.mxu0 0
  %74 = vmatpush2.bf16.msra.mxu0 0
  %75 = vmatprep.subr.bf16.mxu0 0
  %76 = vmatpush2.bf16.msra.mxu0 0
  %77 = vmatprep.subr.bf16.mxu0 0
  %78 = vmatpush2.bf16.msra.mxu0 0
  %79 = vmatprep.subr.bf16.mxu0 0
  %80 = vmatpush2.bf16.msra.mxu0 0
  %81 = vmatprep.subr.bf16.mxu0 0
  %82 = vmatpush2.bf16.msra.mxu0 0
  %83 = vmatprep.mubr.bf16.mxu0 0
  %84 = vmatmul.mubr.bf16.gmra.mxu0 %v49
  %v85 = vpop.f32.mrf.mxu0
  %v86 = vadd.f32 %v33, %v85
  %v87 = vpop.f32.mrf.mxu0
  %v88 = vpop.f32.mrf.mxu0
  %v89 = vadd.f32 %v33, %v88
  %v90 = vpop.f32.mrf.mxu0
  %91 = vdwg.mxu0
  %v92 = vmax.f32 %v86, 0.0
  %v93 = vmax.f32 %v89, 0.0
  %v94 = vpack.c.bf16 %v93, %v92
  %v95 = vld [vmem:[%s3] sm:$0xf]
  %v96 = vld [vmem:[%s3 + $0x4] sm:$0xf]
  %v97 = vld [vmem:[%s3 + $0x8] sm:$0xf]
  %v98 = vld [vmem:[%s3 + $0xc] sm:$0xf]
  %v99 = vld [vmem:[%s3 + $0x10] sm:$0xf]
  %v100 = vld [vmem:[%s3 + $0x14] sm:$0xf]
  %v101 = vld [vmem:[%s3 + $0x18] sm:$0xf]
  %v102 = vld [vmem:[%s3 + $0x1c] sm:$0xf]
  %v103 = vld [vmem:[%s4] sm:$0x1]
  %v105 = vlaneseq
  %v106 = vshrl.u32 %v105, 7
  %v107 = vsub.s32 0, %v106
  %v108 = vrot.slane %v103, %v107
  %v118 = vunpack.c.l.b16 %v95
  %v119 = vunpack.c.l.b16 %v96
  %v120 = vunpack.c.l.b16 %v97
  %v121 = vunpack.c.l.b16 %v98
  %v122 = vunpack.c.l.b16 %v99
  %v123 = vunpack.c.l.b16 %v100
  %v124 = vunpack.c.l.b16 %v101
  %v125 = vunpack.c.l.b16 %v102
  %v126 = vpack.c.b16 %v119, %v118
  %v127 = vpack.c.b16 %v121, %v120
  %v128 = vpack.c.b16 %v123, %v122
  %v129 = vpack.c.b16 %v125, %v124
  %vm134 = vcmask 523264
  %v136 = vsel %vm134, %v94, 0
  %138 = vmatprep.subr.bf16.mxu0 0
  %139 = vmatpush1.bf16.msra.mxu0 0
  %140 = vmatprep.subr.bf16.mxu0 0
  %141 = vmatpush1.bf16.msra.mxu0 0
  %142 = vmatprep.subr.bf16.mxu0 0
  %143 = vmatpush1.bf16.msra.mxu0 0
  %144 = vmatprep.subr.bf16.mxu0 0
  %145 = vmatpush1.bf16.msra.mxu0 0
  %146 = vmatprep.subr.bf16.mxu0 0
  %147 = vmatpush1.bf16.msra.mxu0 %v129
  %148 = vmatprep.subr.bf16.mxu0 0
  %149 = vmatpush1.bf16.msra.mxu0 %v128
  %150 = vmatprep.subr.bf16.mxu0 0
  %151 = vmatpush1.bf16.msra.mxu0 %v127
  %152 = vmatprep.subr.bf16.mxu0 0
  %153 = vmatpush1.bf16.msra.mxu0 %v126
  %154 = vmatprep.subr.bf16.mxu0 0
  %155 = vmatpush2.bf16.msra.mxu0 0
  %156 = vmatprep.subr.bf16.mxu0 0
  %157 = vmatpush2.bf16.msra.mxu0 0
  %158 = vmatprep.subr.bf16.mxu0 0
  %159 = vmatpush2.bf16.msra.mxu0 0
  %160 = vmatprep.subr.bf16.mxu0 0
  %161 = vmatpush2.bf16.msra.mxu0 0
  %162 = vmatprep.subr.bf16.mxu0 0
  %163 = vmatpush2.bf16.msra.mxu0 0
  %164 = vmatprep.subr.bf16.mxu0 0
  %165 = vmatpush2.bf16.msra.mxu0 0
  %166 = vmatprep.subr.bf16.mxu0 0
  %167 = vmatpush2.bf16.msra.mxu0 0
  %168 = vmatprep.subr.bf16.mxu0 0
  %169 = vmatpush2.bf16.msra.mxu0 0
  %170 = vmatprep.mubr.bf16.mxu0 0
  %171 = vmatmul.mubr.bf16.gmra.mxu0 %v136
  %v172 = vpop.f32.mrf.mxu0
  %v173 = vadd.f32 %v108, %v172
  %v174 = vpop.f32.mrf.mxu0
  %v175 = vpop.f32.mrf.mxu0
  %v176 = vadd.f32 %v108, %v175
  %v177 = vpop.f32.mrf.mxu0
  %178 = vdwg.mxu0
  %179 = vst.msk [vmem:[%s5] sm:$0xff] %vm47, %v173
  %180 = vst.msk [vmem:[%s5 + $0x8] sm:$0xff] %vm47, %v176
  // Predicated region
  $region22: #{explainable_model_forward.1} parent=0 // pred_check
    _
  $region23: #{explainable_model_forward.1} parent=0 // pred_check_branch
    %182 = sbr.rel (0) target = $region25
  $region24: #{explainable_model_forward.1} parent=0 // pred_region
    _
  $region25: #{explainable_model_forward.1} parent=0 // pred_fallthru
    _
  // Predicated region
  $region26: #{explainable_model_forward.1} parent=0 // pred_check
    _
  $region27: #{explainable_model_forward.1} parent=0 // pred_check_branch
    %184 = sbr.rel (0) target = $region29
  $region28: #{explainable_model_forward.1} parent=0 // pred_region
    _
  $region29: #{explainable_model_forward.1} parent=0 // pred_fallthru
    _

</llo_original>
